<compile_context>
chip_gen: v5e
topology: v5e:2x2
jax: 0.10.0
libtpu: 0.0.40
codegen_flags: <defaults>
</compile_context>

<pallas_src>
import jax
import jax.numpy as jnp
from jax.experimental import pallas as pl
from jax.experimental.pallas import tpu as pltpu


def _round_up(x, m):
    return ((x + m - 1) // m) * m


def _linear_sigmoid_kernel_single_k(x_ref, w_ref, b_ref, o_ref):
    # x_ref: (tm, K), w_ref: (K, tn), b_ref: (1, tn), o_ref: (tm, tn)
    # Entire contraction in one MXU pass; no scratch, no accumulator copy.
    z = jnp.dot(x_ref[...], w_ref[...], preferred_element_type=jnp.float32)
    z = z + b_ref[...].astype(jnp.float32)
    o_ref[...] = jax.nn.sigmoid(z).astype(o_ref.dtype)


def _linear_sigmoid_kernel_multi_k(x_ref, w_ref, b_ref, o_ref, acc_ref):
    # x_ref: (tm, tk), w_ref: (tk, tn), b_ref: (1, tn), o_ref: (tm, tn)
    # acc_ref: (tm, tn) f32 scratch, resident across the K (last, arbitrary) axis.
    k = pl.program_id(2)

    @pl.when(k == 0)
    def _():
        acc_ref[...] = jnp.zeros_like(acc_ref)

    acc_ref[...] += jnp.dot(
        x_ref[...], w_ref[...], preferred_element_type=jnp.float32
    )

    @pl.when(k == pl.num_programs(2) - 1)
    def _():
        z = acc_ref[...] + b_ref[...].astype(jnp.float32)
        # sigmoid: exp + reciprocal live on the EUP slot -> effectively free.
        o_ref[...] = jax.nn.sigmoid(z).astype(o_ref.dtype)


@jax.jit
def neural_network_forward(x, weight, bias):
    """sigmoid(x @ weight.T + bias) with weight in PyTorch layout [OUT, IN]."""
    B, in_f = x.shape
    out_f, in_f_w = weight.shape
    assert in_f == in_f_w, "weight / input feature mismatch"

    # Pre-transpose once in the wrapper: [OUT, IN] -> [IN, OUT] (MXU-friendly).
    w_t = weight.T
    b2 = bias.reshape(1, out_f)

    # Tile sizes: lane-dense (multiples of 128 on the last dim), sublane-aligned
    # batch tiles. Grow toward 128/256/512 for larger problems, shrink (via
    # rounding) for toy shapes so we do not waste VMEM.
    tm = min(128, _round_up(B, 8))
    tn = min(256, _round_up(out_f, 128))
    tk = min(512, _round_up(in_f, 128))

    Bp = _round_up(B, tm)
    Kp = _round_up(in_f, tk)
    Np = _round_up(out_f, tn)

    # Zero-pad to tile boundaries (zeros contribute nothing to the contraction;
    # padded output columns are sliced off below). No-op when already aligned.
    if (Bp, Kp) != (B, in_f):
        x = jnp.pad(x, ((0, Bp - B), (0, Kp - in_f)))
    if (Kp, Np) != (in_f, out_f):
        w_t = jnp.pad(w_t, ((0, Kp - in_f), (0, Np - out_f)))
    if Np != out_f:
        b2 = jnp.pad(b2, ((0, 0), (0, Np - out_f)))

    if Kp == tk:
        # Fast path: whole K in one tile -> no K grid axis, no scratch.
        out_padded = pl.pallas_call(
            _linear_sigmoid_kernel_single_k,
            out_shape=jax.ShapeDtypeStruct((Bp, Np), x.dtype),
            grid=(Bp // tm, Np // tn),
            in_specs=[
                pl.BlockSpec((tm, Kp), lambda i, j: (i, 0)),   # x tile
                pl.BlockSpec((Kp, tn), lambda i, j: (0, j)),   # W^T tile
                pl.BlockSpec((1, tn), lambda i, j: (0, j)),    # bias tile (N only)
            ],
            out_specs=pl.BlockSpec((tm, tn), lambda i, j: (i, j)),
            compiler_params=pltpu.CompilerParams(
                dimension_semantics=("parallel", "parallel"),
                vmem_limit_bytes=64 * 1024 * 1024,
            ),
        )(x, w_t, b2)
    else:
        grid = (Bp // tm, Np // tn, Kp // tk)
        out_padded = pl.pallas_call(
            _linear_sigmoid_kernel_multi_k,
            out_shape=jax.ShapeDtypeStruct((Bp, Np), x.dtype),
            grid=grid,
            in_specs=[
                pl.BlockSpec((tm, tk), lambda i, j, k: (i, k)),   # x tile
                pl.BlockSpec((tk, tn), lambda i, j, k: (k, j)),   # W^T tile
                pl.BlockSpec((1, tn), lambda i, j, k: (0, j)),    # bias tile (N only)
            ],
            out_specs=pl.BlockSpec((tm, tn), lambda i, j, k: (i, j)),
            scratch_shapes=[pltpu.VMEM((tm, tn), jnp.float32)],
            compiler_params=pltpu.CompilerParams(
                dimension_semantics=("parallel", "parallel", "arbitrary"),
                vmem_limit_bytes=64 * 1024 * 1024,
            ),
        )(x, w_t, b2)

    return out_padded[:B, :out_f]


if __name__ == "__main__":
    # Small shapes consistent with the module's forward: x [batch, input_size]
    batch = 8
    input_size = 32
    output_size = 16

    key = jax.random.PRNGKey(0)
    k_x, k_w, k_b = jax.random.split(key, 3)

    x = jax.random.normal(k_x, (batch, input_size), dtype=jnp.float32)

    # Deterministic parameter init mimicking nn.Linear default U(-1/sqrt(in), 1/sqrt(in))
    bound = 1.0 / (input_size ** 0.5)
    weight = jax.random.uniform(
        k_w, (output_size, input_size), dtype=jnp.float32, minval=-bound, maxval=bound
    )
    bias = jax.random.uniform(
        k_b, (output_size,), dtype=jnp.float32, minval=-bound, maxval=bound
    )

    out = neural_network_forward(x, weight, bias)
    out = jax.block_until_ready(out)

    # Reference check in plain JAX
    ref = jax.nn.sigmoid(x @ weight.T + bias)
    assert out.shape == (batch, output_size)
    assert jnp.allclose(out, ref, atol=1e-5, rtol=1e-5)

    print("KERNEL_OK")
</pallas_src>

<mosaic_0001>
module attributes {stable_mosaic.version = 11 : i64} {
  func.func @_linear_sigmoid_kernel_single_k(%arg0: i32, %arg1: i32, %arg2: memref<8x128xf32, #tpu.memory_space<vmem>>, %arg3: memref<128x128xf32, #tpu.memory_space<vmem>>, %arg4: memref<1x128xf32, #tpu.memory_space<vmem>>, %arg5: memref<8x128xf32, #tpu.memory_space<vmem>>) attributes {dimension_semantics = [#tpu.dimension_semantics<parallel>, #tpu.dimension_semantics<parallel>], iteration_bounds = array<i64: 1, 1>, scalar_prefetch = 0 : i64, scratch_operands = 0 : i64, tpu.core_type = #tpu.core_type<tc>, window_params = [{transform_indices = @transform_0, window_bounds = array<i64: 8, 128>}, {transform_indices = @transform_1, window_bounds = array<i64: 128, 128>}, {transform_indices = @transform_2, window_bounds = array<i64: 1, 128>}, {transform_indices = @transform_3, window_bounds = array<i64: 8, 128>}]} {
    %c0 = arith.constant 0 : index
    %c0_0 = arith.constant 0 : index
    %0 = vector.load %arg2[%c0, %c0_0] : memref<8x128xf32, #tpu.memory_space<vmem>>, vector<8x128xf32>
    %c0_1 = arith.constant 0 : index
    %c0_2 = arith.constant 0 : index
    %1 = vector.load %arg3[%c0_1, %c0_2] : memref<128x128xf32, #tpu.memory_space<vmem>>, vector<128x128xf32>
    %cst = arith.constant dense<0.000000e+00> : vector<8x128xf32>
    %2 = tpu.matmul %0, %1, %cst {dimension_numbers = #tpu.dot_dimension_numbers<[1], [0], [0], [1], [0, 0, 1, 1], [], []>} : vector<8x128xf32>, vector<128x128xf32>, vector<8x128xf32> -> vector<8x128xf32>
    %c0_3 = arith.constant 0 : index
    %c0_4 = arith.constant 0 : index
    %3 = vector.load %arg4[%c0_3, %c0_4] : memref<1x128xf32, #tpu.memory_space<vmem>>, vector<1x128xf32>
    %4 = vector.broadcast %3 : vector<1x128xf32> to vector<8x128xf32>
    %5 = arith.addf %2, %4 : vector<8x128xf32>
    %6 = arith.negf %5 : vector<8x128xf32>
    %7 = math.exp %6 : vector<8x128xf32>
    %cst_5 = arith.constant 1.000000e+00 : f32
    %8 = vector.broadcast %cst_5 : f32 to vector<8x128xf32>
    %9 = arith.addf %8, %7 : vector<8x128xf32>
    %10 = arith.divf %8, %9 : vector<8x128xf32>
    %c0_6 = arith.constant 0 : index
    %c0_7 = arith.constant 0 : index
    %11 = vector.load %arg5[%c0_6, %c0_7] : memref<8x128xf32, #tpu.memory_space<vmem>>, vector<8x128xf32>
    tpu.vector_store %arg5[%c0_6, %c0_7], %10 {strides = array<i32>} : memref<8x128xf32, #tpu.memory_space<vmem>>, vector<8x128xf32>,
    return
  }
  func.func @transform_0(%arg0: i32, %arg1: i32) -> (i32, i32) {
    %c0_i32 = arith.constant 0 : i32
    %c0_i32_0 = arith.constant 0 : i32
    return %arg0, %c0_i32 : i32, i32
  }
  func.func @transform_1(%arg0: i32, %arg1: i32) -> (i32, i32) {
    %c0_i32 = arith.constant 0 : i32
    %c0_i32_0 = arith.constant 0 : i32
    return %c0_i32, %arg1 : i32, i32
  }
  func.func @transform_2(%arg0: i32, %arg1: i32) -> (i32, i32) {
    %c0_i32 = arith.constant 0 : i32
    %c0_i32_0 = arith.constant 0 : i32
    return %c0_i32, %arg1 : i32, i32
  }
  func.func @transform_3(%arg0: i32, %arg1: i32) -> (i32, i32) {
    %c0_i32 = arith.constant 0 : i32
    return %arg0, %arg1 : i32, i32
  }
}

</mosaic_0001>

<llo_original>
// kernel: neural_network_forward.1
$region0: #{neural_network_forward.1}
  #allocation0 [shape = 'u32[]', space=smem, size = 0x4, offset = 0x4, fixed_abs, tag = 'smem constant byte address 0x4 - core index']
  #allocation1 [shape = 'u32[72,128]{1,0:T(1,128)}', space=vmem, size = 0x9000, scoped, tag = 'internal scratch']
  %s0 = inlined_call_operand.vmem [shape: f32[8,128], index: 0, kind: input, shape index: {}]
  %s1 = inlined_call_operand.vmem [shape: f32[128,128], index: 1, kind: input, shape index: {}]
  %s2 = inlined_call_operand.vmem [shape: f32[1,128], index: 2, kind: input, shape index: {}]
  %s3 = inlined_call_operand.hbm [shape: f32[8,128], index: 3, kind: output, shape index: {}]
  %s4 = sld [smem:[#allocation0]]
  $region22: #{neural_network_forward.1} parent=0
    _
  %s6 = ssub.s32 1, %s4
  %s7 = scalar_select 0, %s6, %s4
  $region1: #{neural_network_forward.1} parent=0
    #allocation2 [shape = 'u8[4096]{0}', space=vmem, size = 0x1000, scoped, tag = 'output window, operand 0, single buffered']
    #allocation3 [shape = 's32[1]{0}', space=sflag, size = 0x4, scoped, tag = 'scoped memory for neural_network_forward.1']
    %8 = vsyncpa [#allocation3], 0
    // Predicated region
    $region2: #{neural_network_forward.1} parent=1 // pred_check
      _
    $region3: #{neural_network_forward.1} parent=1 // pred_check_branch
      %10 = sbr.rel (0) target = $region5
    $region4: #{neural_network_forward.1} parent=1 // pred_region
      _
    $region5: #{neural_network_forward.1} parent=1 // pred_fallthru
      _
    // Predicated region
    $region6: #{neural_network_forward.1} parent=1 // pred_check
      _
    $region7: #{neural_network_forward.1} parent=1 // pred_check_branch
      %12 = sbr.rel (0) target = $region9
    $region8: #{neural_network_forward.1} parent=1 // pred_region
      _
    $region9: #{neural_network_forward.1} parent=1 // pred_fallthru
      _
    // Predicated region
    $region10: #{neural_network_forward.1} parent=1 // pred_check
      _
    $region11: #{neural_network_forward.1} parent=1 // pred_check_branch
      %14 = sbr.rel (0) target = $region13
    $region12: #{neural_network_forward.1} parent=1 // pred_region
      _
    $region13: #{neural_network_forward.1} parent=1 // pred_fallthru
      _
    %v15 = vld [vmem:[%s0] sm:$0xff]
    %v16 = vld [vmem:[%s1] sm:$0xff]
    %v17 = vld [vmem:[%s1 + $0x8] sm:$0xff]
    %v18 = vld [vmem:[%s1 + $0x10] sm:$0xff]
    %v19 = vld [vmem:[%s1 + $0x18] sm:$0xff]
    %v20 = vld [vmem:[%s1 + $0x20] sm:$0xff]
    %v21 = vld [vmem:[%s1 + $0x28] sm:$0xff]
    %v22 = vld [vmem:[%s1 + $0x30] sm:$0xff]
    %v23 = vld [vmem:[%s1 + $0x38] sm:$0xff]
    %v24 = vld [vmem:[%s1 + $0x40] sm:$0xff]
    %v25 = vld [vmem:[%s1 + $0x48] sm:$0xff]
    %v26 = vld [vmem:[%s1 + $0x50] sm:$0xff]
    %v27 = vld [vmem:[%s1 + $0x58] sm:$0xff]
    %v28 = vld [vmem:[%s1 + $0x60] sm:$0xff]
    %v29 = vld [vmem:[%s1 + $0x68] sm:$0xff]
    %v30 = vld [vmem:[%s1 + $0x70] sm:$0xff]
    %v31 = vld [vmem:[%s1 + $0x78] sm:$0xff]
    %v32 = vld [vmem:[%s2] sm:$0x1]
    %v34 = vperm.slane %v32, 0
    %36 = vmatpush.msra.mxu0 %v31
    %37 = vmatpush.msra.mxu0 %v30
    %38 = vmatpush.msra.mxu0 %v29
    %39 = vmatpush.msra.mxu0 %v28
    %40 = vmatpush.msra.mxu0 %v27
    %41 = vmatpush.msra.mxu0 %v26
    %42 = vmatpush.msra.mxu0 %v25
    %43 = vmatpush.msra.mxu0 %v24
    %44 = vmatpush.msra.mxu0 %v23
    %45 = vmatpush.msra.mxu0 %v22
    %46 = vmatpush.msra.mxu0 %v21
    %47 = vmatpush.msra.mxu0 %v20
    %48 = vmatpush.msra.mxu0 %v19
    %49 = vmatpush.msra.mxu0 %v18
    %50 = vmatpush.msra.mxu0 %v17
    %51 = vmatpush.msra.mxu0 %v16
    %52 = vmatmul.f32.gmra.mxu0 %v15
    %v53 = vpop.f32.mrf.mxu0
    %v54 = vadd.f32 %v34, %v53
    %55 = vdwg.mxu0
    %v56 = vxor.u32 %v54, 2147483648
    %v57 = vmul.f32 %v56, 1.442695
    %v58 = vpow.pop %v57
    %v59 = vadd.f32 %v58, 1.0
    %v60 = vrcp.pop %v59
    %v61 = vmul.f32 %v59, %v60
    %v62 = vsub.f32 1.0, %v61
    %v63 = vmul.f32 %v60, %v62
    %v64 = vadd.f32 %v60, %v63
    %vm65 = vweird.f32 %v59
    %vm66 = vweird.f32 %v60
    %vm67 = vmor %vm65, %vm66
    %v68 = vsel %vm67, %v60, %v64
    %v69 = vand.u32 2147483647, %v59
    %vm70 = vcmp.eq.f32.partialorder %v69, 8.507059e+37
    %v71 = vand.u32 %v59, 2147483648
    %v72 = vor.u32 1.1754944e-38, %v71
    %v73 = vsel %vm70, %v72, %v68
    %v74 = vmul.f32 1.0, %v73
    %75 = vst [vmem:[#allocation2] sm:$0xff] %v74
    // Predicated region
    $region14: #{neural_network_forward.1} parent=1 // pred_check
      _
    $region15: #{neural_network_forward.1} parent=1 // pred_check_branch
      %77 = sbr.rel (0) target = $region17
    $region16: #{neural_network_forward.1} parent=1 // pred_region
      %79 = vsyncadd [#allocation3], 0
      %s81 = sshll.u32 [#allocation2], 4
      %s82 = int_to_ptr.vmem [resolvable:$true] %s81
      %s83 = sshll.u32 %s3, 4
      %s84 = int_to_ptr.hbm [resolvable:$true] %s83
      %86 = dma.vmem_to_hbm [thread:$0]  %s82, 128, %s84, [#allocation3]
    $region17: #{neural_network_forward.1} parent=1 // pred_fallthru
      _
    // Predicated region
    $region18: #{neural_network_forward.1} parent=1 // pred_check
      _
    $region19: #{neural_network_forward.1} parent=1 // pred_check_branch
      %88 = sbr.rel (0) target = $region21
    $region20: #{neural_network_forward.1} parent=1 // pred_region
      %90 = dma.done [#allocation3], 128
    $region21: #{neural_network_forward.1} parent=1 // pred_fallthru
      _
    %91 = vsyncpa [#allocation3], 1

</llo_original>
